<compile_context>
chip_gen: v5e
topology: v5e:2x2
jax: 0.10.0
libtpu: 0.0.40
codegen_flags: <defaults>
</compile_context>

<pallas_src>
import jax
import jax.numpy as jnp
from jax.experimental import pallas as pl
from jax.experimental.pallas import tpu as pltpu


def _round_up(n, m):
    return ((n + m - 1) // m) * m


def _vmem_capacity_bytes():
    """Physical VMEM per TensorCore: 128 MiB on v5e/v6e, 64 MiB on v7x."""
    try:
        cap = getattr(pltpu.get_tpu_info(), "vmem_capacity_bytes", None)
        if cap:
            return int(cap)
    except Exception:
        pass
    return 64 * 1024 * 1024  # conservative default (v7x)


def _single_buffer_supported():
    """Probe pipeline_mode=pl.Buffered(1) (single-buffered resident weights)."""
    try:
        pl.BlockSpec((8, 128), lambda i: (0, 0), pipeline_mode=pl.Buffered(1))
        return True
    except Exception:
        return False


_SINGLE_BUFFER_WEIGHTS = _single_buffer_supported()


# ---------------------------------------------------------------------------
# Kernel: one fused step of sigmoid(relu(x @ W1 + b1) @ W2 + b2) per batch tile.
# ---------------------------------------------------------------------------
def _mlp_atter_kernel(x_ref, w1_ref, b1_ref, w2_ref, b2_ref, o_ref):
    # fc1: (tb, in) @ (in, dim_p); bf16 MXU inputs, f32 accumulation.
    x_bf = x_ref[...].astype(jnp.bfloat16)        # no-op if caller streams bf16 x
    h = jnp.dot(x_bf, w1_ref[...], preferred_element_type=jnp.float32)
    h = jnp.maximum(h + b1_ref[...], 0.0)         # bias + ReLU in f32 (VPU)
    # fc2: (tb, dim_p) @ (dim_p, in)
    y = jnp.dot(h.astype(jnp.bfloat16), w2_ref[...],
                preferred_element_type=jnp.float32)
    y = y + b2_ref[...]
    # sigmoid = 1 / (1 + exp(-y)): EUP exp + EUP approximate reciprocal.
    o_ref[...] = pl.reciprocal(1.0 + jnp.exp(-y), approx=True).astype(o_ref.dtype)


# ---------------------------------------------------------------------------
# One-time parameter prep (hoisted out of the per-call wrapper).
# ---------------------------------------------------------------------------
def prepare_params(fc1_w, fc1_b, fc2_w, fc2_b):
    """Transpose PyTorch-layout weights, cast to bf16, pad ONLY the hidden dim.

    fc1_w: (dim, input_size)   fc1_b: (dim,)
    fc2_w: (input_size, dim)   fc2_b: (input_size,)

    The input/output feature dim is deliberately left unpadded so x and the
    result never need padded HBM copies or a post-kernel slice.  Padded hidden
    columns/rows are zero, so they contribute nothing to either matmul.
    """
    dim, input_size = fc1_w.shape
    dim_p = _round_up(dim, 128)
    # NOTE: in an MXU-bound regime (very large dim) pad to 256 on v6e/v7x.
    w1p = jnp.zeros((input_size, dim_p), jnp.bfloat16).at[:, :dim].set(
        fc1_w.T.astype(jnp.bfloat16))
    b1p = jnp.zeros((1, dim_p), jnp.float32).at[:, :dim].set(
        fc1_b.reshape(1, dim).astype(jnp.float32))
    w2p = jnp.zeros((dim_p, input_size), jnp.bfloat16).at[:dim, :].set(
        fc2_w.T.astype(jnp.bfloat16))
    b2p = fc2_b.reshape(1, input_size).astype(jnp.float32)
    return w1p, b1p, w2p, b2p


def ddsm_a2l_atter(x, params, *, out_dtype=None, block_b=None):
    """Fused sigmoid(relu(x @ W1 + b1) @ W2 + b2) as a single Pallas kernel.

    x      : (B, input_size); supply bf16 for best throughput (the MXU
             truncates to bf16 anyway, so the HBM read halves for free).
    params : output of prepare_params (bf16 weights, f32 biases).
    """
    w1p, b1p, w2p, b2p = params
    B, input_size = x.shape
    dim_p = w1p.shape[1]
    assert w1p.shape == (input_size, dim_p)
    assert w2p.shape == (dim_p, input_size)
    out_dtype = jnp.dtype(out_dtype or x.dtype)
    x_bytes = jnp.dtype(x.dtype).itemsize
    o_bytes = out_dtype.itemsize

    # ---- generation-aware VMEM budget ----
    vmem_cap = _vmem_capacity_bytes()
    wbuf = 1 if _SINGLE_BUFFER_WEIGHTS else 2
    w_bytes = wbuf * ((w1p.size + w2p.size) * 2 + (b1p.size + b2p.size) * 4)
    if w_bytes > int(0.7 * vmem_cap):
        # TODO(synk): dim_p-tiled reduction fallback for weights > VMEM budget.
        raise ValueError("hidden dim too large for VMEM-resident weights")

    # Per batch-row VMEM bytes: double-buffered x/out blocks + in-kernel temps
    # (bf16 x copy, f32 h, bf16 h, f32 y + sigmoid temp).
    row_bytes = (2 * input_size * x_bytes
                 + 2 * input_size * o_bytes
                 + input_size * 2
                 + dim_p * (4 + 2)
                 + input_size * 8)
    act_budget = max(int(0.6 * vmem_cap) - w_bytes, 512 * 1024)

    # ---- batch tile: clamp the TILE (never the VMEM limit) to the budget ----
    tb = max(16, (act_budget // row_bytes) // 16 * 16)  # 16-row: bf16 sublane pack
    if block_b is not None:
        tb = min(tb, max(8, (block_b // 8) * 8))
    if B <= tb:
        if B >= 16:
            tb = _round_up(pl.cdiv(B, 2), 8)   # >= 2 grid tiles -> both v7x TCs
        else:
            tb = B                             # single full-extent tile
    grid = (pl.cdiv(B, tb),)                   # ragged edge: Pallas masks last block

    vmem_limit = int(w_bytes + tb * row_bytes + 4 * 1024 * 1024)
    vmem_limit = min(max(vmem_limit, 8 * 1024 * 1024), int(0.9 * vmem_cap))

    if _SINGLE_BUFFER_WEIGHTS:
        def res_spec(shape):
            return pl.BlockSpec(shape, lambda i: (0, 0),
                                pipeline_mode=pl.Buffered(1))
    else:
        def res_spec(shape):
            return pl.BlockSpec(shape, lambda i: (0, 0))

    return pl.pallas_call(
        _mlp_atter_kernel,
        out_shape=jax.ShapeDtypeStruct((B, input_size), out_dtype),
        grid_spec=pltpu.PrefetchScalarGridSpec(
            num_scalar_prefetch=0,
            grid=grid,
            in_specs=[
                pl.BlockSpec((tb, input_size), lambda i: (i, 0)),  # x: batch-streamed
                res_spec((input_size, dim_p)),                     # W1: VMEM resident
                res_spec((1, dim_p)),                              # b1: VMEM resident
                res_spec((dim_p, input_size)),                     # W2: VMEM resident
                res_spec((1, input_size)),                         # b2: VMEM resident
            ],
            out_specs=pl.BlockSpec((tb, input_size), lambda i: (i, 0)),
        ),
        compiler_params=pltpu.CompilerParams(
            dimension_semantics=("parallel",),
            vmem_limit_bytes=vmem_limit,
        ),
    )(x, w1p, b1p, w2p, b2p)


if __name__ == "__main__":
    key = jax.random.PRNGKey(0)
    kx, k1, k2, k3, k4 = jax.random.split(key, 5)

    batch, input_size, dim = 8, 32, 64

    # PyTorch nn.Linear default init: U(-1/sqrt(fan_in), +1/sqrt(fan_in)).
    b_in = 1.0 / float(jnp.sqrt(jnp.float32(input_size)))
    b_hd = 1.0 / float(jnp.sqrt(jnp.float32(dim)))
    fc1_w = jax.random.uniform(k1, (dim, input_size), jnp.float32, -b_in, b_in)
    fc1_b = jax.random.uniform(k2, (dim,), jnp.float32, -b_in, b_in)
    fc2_w = jax.random.uniform(k3, (input_size, dim), jnp.float32, -b_hd, b_hd)
    fc2_b = jax.random.uniform(k4, (input_size,), jnp.float32, -b_hd, b_hd)

    x = jax.random.normal(kx, (batch, input_size), jnp.float32)

    params = prepare_params(fc1_w, fc1_b, fc2_w, fc2_b)   # hoisted: prep once
    out = jax.block_until_ready(ddsm_a2l_atter(x, params))

    # Plain-f32 reference (kernel uses bf16 MXU inputs + approx reciprocal,
    # so tolerance is bf16-level).
    ref = jax.nn.sigmoid(
        jnp.maximum(x @ fc1_w.T + fc1_b, 0.0) @ fc2_w.T + fc2_b)
    assert out.shape == (batch, input_size)
    assert out.dtype == x.dtype
    max_err = float(jnp.max(jnp.abs(out - ref)))
    assert max_err < 2e-2, max_err

    print("KERNEL_OK")
</pallas_src>

<mosaic_0001>
module attributes {stable_mosaic.version = 11 : i64} {
  func.func @_mlp_atter_kernel(%arg0: i32, %arg1: memref<8x32xf32, #tpu.memory_space<vmem>>, %arg2: memref<32x128xbf16, #tpu.memory_space<vmem>>, %arg3: memref<1x128xf32, #tpu.memory_space<vmem>>, %arg4: memref<128x32xbf16, #tpu.memory_space<vmem>>, %arg5: memref<1x32xf32, #tpu.memory_space<vmem>>, %arg6: memref<8x32xf32, #tpu.memory_space<vmem>>) attributes {dimension_semantics = [#tpu.dimension_semantics<parallel>], iteration_bounds = array<i64: 1>, scalar_prefetch = 0 : i64, scratch_operands = 0 : i64, tpu.core_type = #tpu.core_type<tc>, window_params = [{transform_indices = @transform_0, window_bounds = array<i64: 8, 32>}, {pipeline_mode = #tpu.pipeline_mode<synchronous>, transform_indices = @transform_1, window_bounds = array<i64: 32, 128>}, {pipeline_mode = #tpu.pipeline_mode<synchronous>, transform_indices = @transform_2, window_bounds = array<i64: 1, 128>}, {pipeline_mode = #tpu.pipeline_mode<synchronous>, transform_indices = @transform_3, window_bounds = array<i64: 128, 32>}, {pipeline_mode = #tpu.pipeline_mode<synchronous>, transform_indices = @transform_4, window_bounds = array<i64: 1, 32>}, {transform_indices = @transform_5, window_bounds = array<i64: 8, 32>}]} {
    %c0 = arith.constant 0 : index
    %c0_0 = arith.constant 0 : index
    %0 = vector.load %arg1[%c0, %c0_0] : memref<8x32xf32, #tpu.memory_space<vmem>>, vector<8x32xf32>
    %1 = arith.truncf %0 : vector<8x32xf32> to vector<8x32xbf16>
    %c0_1 = arith.constant 0 : index
    %c0_2 = arith.constant 0 : index
    %2 = vector.load %arg2[%c0_1, %c0_2] : memref<32x128xbf16, #tpu.memory_space<vmem>>, vector<32x128xbf16>
    %cst = arith.constant dense<0.000000e+00> : vector<8x128xf32>
    %3 = tpu.matmul %1, %2, %cst {dimension_numbers = #tpu.dot_dimension_numbers<[1], [0], [0], [1], [0, 0, 1, 1], [], []>} : vector<8x32xbf16>, vector<32x128xbf16>, vector<8x128xf32> -> vector<8x128xf32>
    %c0_3 = arith.constant 0 : index
    %c0_4 = arith.constant 0 : index
    %4 = vector.load %arg3[%c0_3, %c0_4] : memref<1x128xf32, #tpu.memory_space<vmem>>, vector<1x128xf32>
    %5 = vector.broadcast %4 : vector<1x128xf32> to vector<8x128xf32>
    %6 = arith.addf %3, %5 : vector<8x128xf32>
    %cst_5 = arith.constant 0.000000e+00 : f32
    %7 = vector.broadcast %cst_5 : f32 to vector<8x128xf32>
    %8 = arith.maximumf %6, %7 : vector<8x128xf32>
    %9 = arith.truncf %8 : vector<8x128xf32> to vector<8x128xbf16>
    %c0_6 = arith.constant 0 : index
    %c0_7 = arith.constant 0 : index
    %10 = vector.load %arg4[%c0_6, %c0_7] : memref<128x32xbf16, #tpu.memory_space<vmem>>, vector<128x32xbf16>
    %cst_8 = arith.constant dense<0.000000e+00> : vector<8x32xf32>
    %11 = tpu.matmul %9, %10, %cst_8 {dimension_numbers = #tpu.dot_dimension_numbers<[1], [0], [0], [1], [0, 0, 1, 1], [], []>} : vector<8x128xbf16>, vector<128x32xbf16>, vector<8x32xf32> -> vector<8x32xf32>
    %c0_9 = arith.constant 0 : index
    %c0_10 = arith.constant 0 : index
    %12 = vector.load %arg5[%c0_9, %c0_10] : memref<1x32xf32, #tpu.memory_space<vmem>>, vector<1x32xf32>
    %13 = vector.broadcast %12 : vector<1x32xf32> to vector<8x32xf32>
    %14 = arith.addf %11, %13 : vector<8x32xf32>
    %cst_11 = arith.constant 0.000000e+00 : f32
    %15 = vector.broadcast %cst_11 : f32 to vector<8x32xf32>
    %16 = arith.subf %15, %14 : vector<8x32xf32>
    %17 = math.exp %16 : vector<8x32xf32>
    %cst_12 = arith.constant 1.000000e+00 : f32
    %18 = vector.broadcast %cst_12 : f32 to vector<8x32xf32>
    %19 = arith.addf %18, %17 : vector<8x32xf32>
    %20 = tpu.reciprocal %19 {approx = true} : vector<8x32xf32> -> vector<8x32xf32>
    %c0_13 = arith.constant 0 : index
    %c0_14 = arith.constant 0 : index
    %21 = vector.load %arg6[%c0_13, %c0_14] : memref<8x32xf32, #tpu.memory_space<vmem>>, vector<8x32xf32>
    tpu.vector_store %arg6[%c0_13, %c0_14], %20 {strides = array<i32>} : memref<8x32xf32, #tpu.memory_space<vmem>>, vector<8x32xf32>,
    return
  }
  func.func @transform_0(%arg0: i32) -> (i32, i32) {
    %c0_i32 = arith.constant 0 : i32
    %c0_i32_0 = arith.constant 0 : i32
    return %arg0, %c0_i32 : i32, i32
  }
  func.func @transform_1(%arg0: i32) -> (i32, i32) {
    %c0_i32 = arith.constant 0 : i32
    %c0_i32_0 = arith.constant 0 : i32
    %c0_i32_1 = arith.constant 0 : i32
    return %c0_i32, %c0_i32_0 : i32, i32
  }
  func.func @transform_2(%arg0: i32) -> (i32, i32) {
    %c0_i32 = arith.constant 0 : i32
    %c0_i32_0 = arith.constant 0 : i32
    %c0_i32_1 = arith.constant 0 : i32
    return %c0_i32, %c0_i32_0 : i32, i32
  }
  func.func @transform_3(%arg0: i32) -> (i32, i32) {
    %c0_i32 = arith.constant 0 : i32
    %c0_i32_0 = arith.constant 0 : i32
    %c0_i32_1 = arith.constant 0 : i32
    return %c0_i32, %c0_i32_0 : i32, i32
  }
  func.func @transform_4(%arg0: i32) -> (i32, i32) {
    %c0_i32 = arith.constant 0 : i32
    %c0_i32_0 = arith.constant 0 : i32
    %c0_i32_1 = arith.constant 0 : i32
    return %c0_i32, %c0_i32_0 : i32, i32
  }
  func.func @transform_5(%arg0: i32) -> (i32, i32) {
    %c0_i32 = arith.constant 0 : i32
    %c0_i32_0 = arith.constant 0 : i32
    return %arg0, %c0_i32 : i32, i32
  }
}

</mosaic_0001>

<llo_original>
// kernel: tpu_custom_call.1
$region0: #{tpu_custom_call.1}
  #allocation0 [shape = 'u32[]', space=smem, size = 0x4, offset = 0x4, fixed_abs, tag = 'smem constant byte address 0x4 - core index']
  #allocation1 [shape = 'u32[72,128]{1,0:T(1,128)}', space=vmem, size = 0x9000, scoped, tag = 'internal scratch']
  %s0 = inlined_call_operand.vmem [shape: f32[8,32], index: 0, kind: input, shape index: {}]
  %s1 = inlined_call_operand.vmem [shape: bf16[32,128], index: 1, kind: input, shape index: {}]
  %s2 = inlined_call_operand.vmem [shape: f32[1,128], index: 2, kind: input, shape index: {}]
  %s3 = inlined_call_operand.vmem [shape: bf16[128,32], index: 3, kind: input, shape index: {}]
  %s4 = inlined_call_operand.vmem [shape: f32[1,32], index: 4, kind: input, shape index: {}]
  %s5 = inlined_call_operand.hbm [shape: f32[8,32], index: 5, kind: output, shape index: {}]
  %s6 = sld [smem:[#allocation0]]
  $region30: #{tpu_custom_call.1} parent=0
    _
  %s8 = ssub.s32 1, %s6
  %s9 = scalar_select 0, %s8, %s6
  $region1: #{tpu_custom_call.1} parent=0
    #allocation2 [shape = 'u8[4096]{0}', space=vmem, size = 0x1000, scoped, tag = 'output window, operand 0, single buffered']
    #allocation3 [shape = 's32[1]{0}', space=sflag, size = 0x4, scoped, tag = 'scoped memory for tpu_custom_call.1']
    %10 = vsyncpa [#allocation3], 0
    // Predicated region
    $region2: #{tpu_custom_call.1} parent=1 // pred_check
      _
    $region3: #{tpu_custom_call.1} parent=1 // pred_check_branch
      %12 = sbr.rel (0) target = $region5
    $region4: #{tpu_custom_call.1} parent=1 // pred_region
      _
    $region5: #{tpu_custom_call.1} parent=1 // pred_fallthru
      _
    // Predicated region
    $region6: #{tpu_custom_call.1} parent=1 // pred_check
      _
    $region7: #{tpu_custom_call.1} parent=1 // pred_check_branch
      %14 = sbr.rel (0) target = $region9
    $region8: #{tpu_custom_call.1} parent=1 // pred_region
      _
    $region9: #{tpu_custom_call.1} parent=1 // pred_fallthru
      _
    // Predicated region
    $region10: #{tpu_custom_call.1} parent=1 // pred_check
      _
    $region11: #{tpu_custom_call.1} parent=1 // pred_check_branch
      %16 = sbr.rel (0) target = $region13
    $region12: #{tpu_custom_call.1} parent=1 // pred_region
      _
    $region13: #{tpu_custom_call.1} parent=1 // pred_fallthru
      _
    // Predicated region
    $region14: #{tpu_custom_call.1} parent=1 // pred_check
      _
    $region15: #{tpu_custom_call.1} parent=1 // pred_check_branch
      %18 = sbr.rel (0) target = $region17
    $region16: #{tpu_custom_call.1} parent=1 // pred_region
      _
    $region17: #{tpu_custom_call.1} parent=1 // pred_fallthru
      _
    // Predicated region
    $region18: #{tpu_custom_call.1} parent=1 // pred_check
      _
    $region19: #{tpu_custom_call.1} parent=1 // pred_check_branch
      %20 = sbr.rel (0) target = $region21
    $region20: #{tpu_custom_call.1} parent=1 // pred_region
      _
    $region21: #{tpu_custom_call.1} parent=1 // pred_fallthru
      _
    %v22 = vld [vmem:[%s0] sm:$0xff]
    %v23 = vpack.c.bf16 %v22, %v22
    %v24 = vld [vmem:[%s1] sm:$0xf]
    %v25 = vld [vmem:[%s1 + $0x4] sm:$0xf]
    %v26 = vld [vmem:[%s1 + $0x8] sm:$0xf]
    %v27 = vld [vmem:[%s1 + $0xc] sm:$0xf]
    %v28 = vld [vmem:[%s2] sm:$0x1]
    %v30 = vperm.slane %v28, 0
    %v36 = vunpack.c.l.b16 %v24
    %v37 = vunpack.c.l.b16 %v25
    %v38 = vunpack.c.l.b16 %v26
    %v39 = vunpack.c.l.b16 %v27
    %v40 = vpack.c.b16 %v37, %v36
    %v41 = vpack.c.b16 %v39, %v38
    %vm44 = vcmask 261120
    %v46 = vsel %vm44, %v23, 0
    %48 = vmatpush.bf16.msra.mxu0 0
    %49 = vmatpush.bf16.msra.mxu0 0
    %50 = vmatpush.bf16.msra.mxu0 0
    %51 = vmatpush.bf16.msra.mxu0 0
    %52 = vmatpush.bf16.msra.mxu0 0
    %53 = vmatpush.bf16.msra.mxu0 0
    %54 = vmatpush.bf16.msra.mxu0 %v41
    %55 = vmatpush.bf16.msra.mxu0 %v40
    %56 = vmatmul.bf16.gmra.mxu0 %v46
    %v57 = vpop.f32.mrf.mxu0
    %v58 = vadd.f32 %v30, %v57
    %v59 = vpop.f32.mrf.mxu0
    %60 = vdwg.mxu0
    %v61 = vmax.f32 %v58, 0.0
    %v62 = vpack.c.bf16 %v61, %v61
    %v63 = vld [vmem:[%s3] sm:$0xf]
    %v64 = vld [vmem:[%s3 + $0x4] sm:$0xf]
    %v65 = vld [vmem:[%s3 + $0x8] sm:$0xf]
    %v66 = vld [vmem:[%s3 + $0xc] sm:$0xf]
    %v67 = vld [vmem:[%s3 + $0x10] sm:$0xf]
    %v68 = vld [vmem:[%s3 + $0x14] sm:$0xf]
    %v69 = vld [vmem:[%s3 + $0x18] sm:$0xf]
    %v70 = vld [vmem:[%s3 + $0x1c] sm:$0xf]
    %v71 = vld [vmem:[%s3 + $0x20] sm:$0xf]
    %v72 = vld [vmem:[%s3 + $0x24] sm:$0xf]
    %v73 = vld [vmem:[%s3 + $0x28] sm:$0xf]
    %v74 = vld [vmem:[%s3 + $0x2c] sm:$0xf]
    %v75 = vld [vmem:[%s3 + $0x30] sm:$0xf]
    %v76 = vld [vmem:[%s3 + $0x34] sm:$0xf]
    %v77 = vld [vmem:[%s3 + $0x38] sm:$0xf]
    %v78 = vld [vmem:[%s3 + $0x3c] sm:$0xf]
    %v79 = vld [vmem:[%s4] sm:$0x1]
    %v81 = vperm.slane %v79, 0
    %v99 = vunpack.c.l.b16 %v63
    %v100 = vunpack.c.l.b16 %v64
    %v101 = vunpack.c.l.b16 %v65
    %v102 = vunpack.c.l.b16 %v66
    %v103 = vunpack.c.l.b16 %v67
    %v104 = vunpack.c.l.b16 %v68
    %v105 = vunpack.c.l.b16 %v69
    %v106 = vunpack.c.l.b16 %v70
    %v107 = vunpack.c.l.b16 %v71
    %v108 = vunpack.c.l.b16 %v72
    %v109 = vunpack.c.l.b16 %v73
    %v110 = vunpack.c.l.b16 %v74
    %v111 = vunpack.c.l.b16 %v75
    %v112 = vunpack.c.l.b16 %v76
    %v113 = vunpack.c.l.b16 %v77
    %v114 = vunpack.c.l.b16 %v78
    %v115 = vpack.c.b16 %v100, %v99
    %v116 = vpack.c.b16 %v102, %v101
    %v117 = vpack.c.b16 %v104, %v103
    %v118 = vpack.c.b16 %v106, %v105
    %v119 = vpack.c.b16 %v108, %v107
    %v120 = vpack.c.b16 %v110, %v109
    %v121 = vpack.c.b16 %v112, %v111
    %v122 = vpack.c.b16 %v114, %v113
    %131 = vmatpush.bf16.msra.mxu0 %v122
    %132 = vmatpush.bf16.msra.mxu0 %v121
    %133 = vmatpush.bf16.msra.mxu0 %v120
    %134 = vmatpush.bf16.msra.mxu0 %v119
    %135 = vmatpush.bf16.msra.mxu0 %v118
    %136 = vmatpush.bf16.msra.mxu0 %v117
    %137 = vmatpush.bf16.msra.mxu0 %v116
    %138 = vmatpush.bf16.msra.mxu0 %v115
    %139 = vmatmul.bf16.gmra.mxu0 %v62
    %v140 = vpop.f32.mrf.mxu0
    %v141 = vadd.f32 %v81, %v140
    %v142 = vpop.f32.mrf.mxu0
    %143 = vdwg.mxu0
    %v144 = vsub.f32 0.0, %v141
    %v145 = vmul.f32 %v144, 1.442695
    %v146 = vpow.pop %v145
    %v147 = vadd.f32 %v146, 1.0
    %v148 = vrcp.pop %v147
    %149 = vst.msk [vmem:[#allocation2] sm:$0xff] %vm44, %v148
    // Predicated region
    $region22: #{tpu_custom_call.1} parent=1 // pred_check
      _
    $region23: #{tpu_custom_call.1} parent=1 // pred_check_branch
      %151 = sbr.rel (0) target = $region25
    $region24: #{tpu_custom_call.1} parent=1 // pred_region
      %153 = vsyncadd [#allocation3], 0
      %s155 = sshll.u32 [#allocation2], 4
      %s156 = int_to_ptr.vmem [resolvable:$true] %s155
      %s157 = sshll.u32 %s5, 4
      %s158 = int_to_ptr.hbm [resolvable:$true] %s157
      %160 = dma.vmem_to_hbm [thread:$0]  %s156, 128, %s158, [#allocation3]
    $region25: #{tpu_custom_call.1} parent=1 // pred_fallthru
      _
    // Predicated region
    $region26: #{tpu_custom_call.1} parent=1 // pred_check
      _
    $region27: #{tpu_custom_call.1} parent=1 // pred_check_branch
      %162 = sbr.rel (0) target = $region29
    $region28: #{tpu_custom_call.1} parent=1 // pred_region
      %164 = dma.done [#allocation3], 128
    $region29: #{tpu_custom_call.1} parent=1 // pred_fallthru
      _
    %165 = vsyncpa [#allocation3], 1

</llo_original>
